<compile_context>
chip_gen: v6e
topology: v6e:2x2x1
jax: 0.10.0
libtpu: 0.0.40
codegen_flags: <defaults>
</compile_context>

<pallas_src>
import jax
import jax.numpy as jnp
from jax.experimental import pallas as pl
from jax.experimental.pallas import tpu as pltpu


def discriminator_kernel(x_ref, w1_ref, b1_ref, w2_ref, b2_ref, out_ref):
    # Layer 1: (tb, Din) @ (Din, H) on the MXU, f32 accumulation.
    h = jnp.dot(x_ref[...], w1_ref[...], preferred_element_type=jnp.float32)
    h = jnp.maximum(h + b1_ref[...], 0.0)                       # bias + ReLU (VPU, f32)

    # Layer 2: single fused, lane-dense head (class dim padded to >=128).
    w2 = w2_ref[...]
    logits = jnp.dot(h.astype(w2.dtype), w2, preferred_element_type=jnp.float32)
    out_ref[...] = logits + b2_ref[...]                         # f32 logits out


def _round_up(n, m):
    return ((n + m - 1) // m) * m


def io_discriminator(x, params, *, tb=128, compute_dtype=jnp.bfloat16):
    """Forward pass of InputOutputDiscriminator: returns logits of shape (B, C)."""
    w1, b1, w2, b2 = params
    B, d_in = x.shape
    H = w1.shape[1]
    C = w2.shape[1]

    # Lane-dense logits: pad the class dim to a multiple of 128 so the MXU N
    # dim is well filled and output stores are unmasked; sliced off afterwards.
    c_pad = _round_up(max(C, 128), 128)
    w2p = jnp.pad(w2, ((0, 0), (0, c_pad - C))).astype(compute_dtype)
    b2p = jnp.pad(b2, ((0, 0), (0, c_pad - C))).astype(jnp.float32)
    w1c = w1.astype(compute_dtype)
    b1c = b1.astype(jnp.float32)

    # Batch tiling: large tiles amortize per-step overhead; ragged B is padded.
    tb = max(8, min(tb, _round_up(B, 8)))
    b_pad = _round_up(B, tb)
    xc = x if b_pad == B else jnp.pad(x, ((0, b_pad - B), (0, 0)))
    xc = xc.astype(compute_dtype)
    grid = (b_pad // tb,)

    # Explicit VMEM budget (double-buffered I/O blocks + resident weights),
    # clamped so it fits v5e's default scoped limit up to v7x's 64 MiB VMEM.
    cb = jnp.dtype(compute_dtype).itemsize
    est = (2 * (tb * d_in * cb + tb * c_pad * 4)
           + 2 * (d_in * H * cb + H * c_pad * cb + H * 4 + c_pad * 4)
           + tb * H * 4 + tb * c_pad * 4)
    vmem_limit = int(min(max(2 * est, 16 * 2 ** 20), 48 * 2 ** 20))

    def fixed(shape):
        # Constant block index -> DMA'd once, resident across all batch tiles.
        return pl.BlockSpec(shape, lambda i: (0, 0))

    logits = pl.pallas_call(
        discriminator_kernel,
        out_shape=jax.ShapeDtypeStruct((b_pad, c_pad), jnp.float32),
        grid_spec=pltpu.PrefetchScalarGridSpec(
            num_scalar_prefetch=0,
            grid=grid,
            in_specs=[
                pl.BlockSpec((tb, d_in), lambda i: (i, 0)),
                fixed((d_in, H)), fixed((1, H)),
                fixed((H, c_pad)), fixed((1, c_pad)),
            ],
            out_specs=pl.BlockSpec((tb, c_pad), lambda i: (i, 0)),
        ),
        compiler_params=pltpu.CompilerParams(
            dimension_semantics=("parallel",),
            vmem_limit_bytes=vmem_limit,
        ),
    )(xc, w1c, b1c, w2p, b2p)

    return logits[:B, :C]


def reference(x, params):
    """Pure-JAX f32 reference of the same discriminator net."""
    w1, b1, w2, b2 = params
    h = jnp.maximum(x @ w1 + b1, 0.0)
    return h @ w2 + b2


def make_params(key, d_in, hidden, n_classes):
    k1, k2 = jax.random.split(key)
    w1 = jax.random.normal(k1, (d_in, hidden), jnp.float32) * 0.1
    b1 = jnp.zeros((1, hidden), jnp.float32)
    w2 = jax.random.normal(k2, (hidden, n_classes), jnp.float32) * 0.1
    b2 = jnp.zeros((1, n_classes), jnp.float32)
    return (w1, b1, w2, b2)


if __name__ == "__main__":
    # Discriminator over feature vectors (real input vs decoder output -> 2 classes).
    B, D_IN, HIDDEN, N_CLASSES = 256, 64, 128, 2

    key = jax.random.PRNGKey(0)
    kx, kp = jax.random.split(key)
    x = jax.random.normal(kx, (B, D_IN), jnp.float32)
    params = make_params(kp, D_IN, HIDDEN, N_CLASSES)

    pred = io_discriminator(x, params, tb=128)     # grid = (2,) -> both v7x TCs
    jax.block_until_ready(pred)

    pred_ref = reference(x, params)
    assert pred.shape == (B, N_CLASSES)
    # bf16 matmul inputs (f32 accumulation) -> loosen tolerance accordingly.
    assert jnp.allclose(pred, pred_ref, atol=5e-2, rtol=5e-2), \
        float(jnp.max(jnp.abs(pred - pred_ref)))

    print("KERNEL_OK")
</pallas_src>

<mosaic_0001>
module attributes {stable_mosaic.version = 11 : i64} {
  func.func @discriminator_kernel(%arg0: i32, %arg1: memref<128x64xbf16, #tpu.memory_space<vmem>>, %arg2: memref<64x128xbf16, #tpu.memory_space<vmem>>, %arg3: memref<1x128xf32, #tpu.memory_space<vmem>>, %arg4: memref<128x128xbf16, #tpu.memory_space<vmem>>, %arg5: memref<1x128xf32, #tpu.memory_space<vmem>>, %arg6: memref<128x128xf32, #tpu.memory_space<vmem>>) attributes {dimension_semantics = [#tpu.dimension_semantics<parallel>], iteration_bounds = array<i64: 2>, scalar_prefetch = 0 : i64, scratch_operands = 0 : i64, tpu.core_type = #tpu.core_type<tc>, window_params = [{transform_indices = @transform_0, window_bounds = array<i64: 128, 64>}, {pipeline_mode = #tpu.pipeline_mode<synchronous>, transform_indices = @transform_1, window_bounds = array<i64: 64, 128>}, {pipeline_mode = #tpu.pipeline_mode<synchronous>, transform_indices = @transform_2, window_bounds = array<i64: 1, 128>}, {pipeline_mode = #tpu.pipeline_mode<synchronous>, transform_indices = @transform_3, window_bounds = array<i64: 128, 128>}, {pipeline_mode = #tpu.pipeline_mode<synchronous>, transform_indices = @transform_4, window_bounds = array<i64: 1, 128>}, {transform_indices = @transform_5, window_bounds = array<i64: 128, 128>}]} {
    %c0 = arith.constant 0 : index
    %c0_0 = arith.constant 0 : index
    %0 = vector.load %arg1[%c0, %c0_0] : memref<128x64xbf16, #tpu.memory_space<vmem>>, vector<128x64xbf16>
    %c0_1 = arith.constant 0 : index
    %c0_2 = arith.constant 0 : index
    %1 = vector.load %arg2[%c0_1, %c0_2] : memref<64x128xbf16, #tpu.memory_space<vmem>>, vector<64x128xbf16>
    %cst = arith.constant dense<0.000000e+00> : vector<128x128xf32>
    %2 = tpu.matmul %0, %1, %cst {dimension_numbers = #tpu.dot_dimension_numbers<[1], [0], [0], [1], [0, 0, 1, 1], [], []>} : vector<128x64xbf16>, vector<64x128xbf16>, vector<128x128xf32> -> vector<128x128xf32>
    %c0_3 = arith.constant 0 : index
    %c0_4 = arith.constant 0 : index
    %3 = vector.load %arg3[%c0_3, %c0_4] : memref<1x128xf32, #tpu.memory_space<vmem>>, vector<1x128xf32>
    %4 = vector.broadcast %3 : vector<1x128xf32> to vector<128x128xf32>
    %5 = arith.addf %2, %4 : vector<128x128xf32>
    %cst_5 = arith.constant 0.000000e+00 : f32
    %6 = vector.broadcast %cst_5 : f32 to vector<128x128xf32>
    %7 = arith.maximumf %5, %6 : vector<128x128xf32>
    %c0_6 = arith.constant 0 : index
    %c0_7 = arith.constant 0 : index
    %8 = vector.load %arg4[%c0_6, %c0_7] : memref<128x128xbf16, #tpu.memory_space<vmem>>, vector<128x128xbf16>
    %9 = arith.truncf %7 : vector<128x128xf32> to vector<128x128xbf16>
    %cst_8 = arith.constant dense<0.000000e+00> : vector<128x128xf32>
    %10 = tpu.matmul %9, %8, %cst_8 {dimension_numbers = #tpu.dot_dimension_numbers<[1], [0], [0], [1], [0, 0, 1, 1], [], []>} : vector<128x128xbf16>, vector<128x128xbf16>, vector<128x128xf32> -> vector<128x128xf32>
    %c0_9 = arith.constant 0 : index
    %c0_10 = arith.constant 0 : index
    %11 = vector.load %arg5[%c0_9, %c0_10] : memref<1x128xf32, #tpu.memory_space<vmem>>, vector<1x128xf32>
    %12 = vector.broadcast %11 : vector<1x128xf32> to vector<128x128xf32>
    %13 = arith.addf %10, %12 : vector<128x128xf32>
    %c0_11 = arith.constant 0 : index
    %c0_12 = arith.constant 0 : index
    %14 = vector.load %arg6[%c0_11, %c0_12] : memref<128x128xf32, #tpu.memory_space<vmem>>, vector<128x128xf32>
    tpu.vector_store %arg6[%c0_11, %c0_12], %13 {strides = array<i32>} : memref<128x128xf32, #tpu.memory_space<vmem>>, vector<128x128xf32>,
    return
  }
  func.func @transform_0(%arg0: i32) -> (i32, i32) {
    %c0_i32 = arith.constant 0 : i32
    %c0_i32_0 = arith.constant 0 : i32
    return %arg0, %c0_i32 : i32, i32
  }
  func.func @transform_1(%arg0: i32) -> (i32, i32) {
    %c0_i32 = arith.constant 0 : i32
    %c0_i32_0 = arith.constant 0 : i32
    %c0_i32_1 = arith.constant 0 : i32
    return %c0_i32, %c0_i32_0 : i32, i32
  }
  func.func @transform_2(%arg0: i32) -> (i32, i32) {
    %c0_i32 = arith.constant 0 : i32
    %c0_i32_0 = arith.constant 0 : i32
    %c0_i32_1 = arith.constant 0 : i32
    return %c0_i32, %c0_i32_0 : i32, i32
  }
  func.func @transform_3(%arg0: i32) -> (i32, i32) {
    %c0_i32 = arith.constant 0 : i32
    %c0_i32_0 = arith.constant 0 : i32
    %c0_i32_1 = arith.constant 0 : i32
    return %c0_i32, %c0_i32_0 : i32, i32
  }
  func.func @transform_4(%arg0: i32) -> (i32, i32) {
    %c0_i32 = arith.constant 0 : i32
    %c0_i32_0 = arith.constant 0 : i32
    %c0_i32_1 = arith.constant 0 : i32
    return %c0_i32, %c0_i32_0 : i32, i32
  }
  func.func @transform_5(%arg0: i32) -> (i32, i32) {
    %c0_i32 = arith.constant 0 : i32
    %c0_i32_0 = arith.constant 0 : i32
    return %arg0, %c0_i32 : i32, i32
  }
}

</mosaic_0001>

<llo_original>
// kernel: tpu_custom_call.1
$region0: #{tpu_custom_call.1}
  #allocation0 [shape = 'u32[]', space=smem, size = 0x4, offset = 0x4, fixed_abs, tag = 'smem constant byte address 0x4 - core index']
  #allocation1 [shape = 'u32[144,128]{1,0:T(1,128)}', space=vmem, size = 0x12000, scoped, tag = 'internal scratch']
  %s0 = inlined_call_operand.vmem [shape: bf16[256,64], index: 0, kind: input, shape index: {}]
  %s1 = inlined_call_operand.vmem [shape: bf16[64,128], index: 1, kind: input, shape index: {}]
  %s2 = inlined_call_operand.vmem [shape: f32[1,128], index: 2, kind: input, shape index: {}]
  %s3 = inlined_call_operand.vmem [shape: bf16[128,128], index: 3, kind: input, shape index: {}]
  %s4 = inlined_call_operand.vmem [shape: f32[1,128], index: 4, kind: input, shape index: {}]
  %s5 = inlined_call_operand.hbm [shape: f32[256,128], index: 5, kind: output, shape index: {}]
  %s6 = sld [smem:[#allocation0]]
  $region53: #{tpu_custom_call.1} parent=0
    _
  %s8 = ssub.s32 1, %s6
  %s9 = scalar_select 0, %s8, %s6
  $region1: #{tpu_custom_call.1} parent=0
    #allocation2 [shape = 'u8[131072]{0}', space=vmem, size = 0x20000, scoped, tag = 'output window, operand 0']
    #allocation3 [shape = 's32[2]{0}', space=sflag, size = 0x8, scoped, tag = 'scoped memory for tpu_custom_call.1']
    %10 = vsyncpa [#allocation3], 0
    %s11 = scalar_lea.sflag [#allocation3], 1
    %12 = vsyncpa %s11, 0
    loop: start=0, step=1, limit=4
    $region2: #{tpu_custom_call.1} parent=1 // loop_pre_header
      _
    $region3: #{tpu_custom_call.1} parent=1 // loop_header
      %s14 = sphi 0, %s18
      %p15 = scmp.ge.s32.totalorder %s14, 4
      %s24 = sphi 0, %s26
      %s27 = sphi 0, %s24
      %s28 = sphi 0, %s27
      %s44 = sphi 0, %s28
      %s48 = sphi 0, %s48
      %s50 = sphi 0, %s48
      %s51 = sphi 0, %s50
      %s65 = sphi 0, %s51
      %s69 = sphi 0, %s69
      %s71 = sphi 0, %s69
      %s72 = sphi 0, %s71
      %s86 = sphi 0, %s72
      %s90 = sphi 0, %s90
      %s92 = sphi 0, %s90
      %s93 = sphi 0, %s92
      %s107 = sphi 0, %s93
      %s111 = sphi 0, %s111
      %s113 = sphi 0, %s111
      %s114 = sphi 0, %s113
      %s128 = sphi 0, %s114
      %s134 = sphi 0, %s136
      %s137 = sphi 0, %s134
      %s138 = sphi 0, %s137
      %s154 = sphi 0, %s138
    $region4: #{tpu_custom_call.1} parent=1 // loop_header_branch
      %17 = sbr.rel (%p15) target = $region8
    $region5: #{tpu_custom_call.1} parent=1 // loop_body
      %s19 = ssub.s32 %s14, 1
      %s20 = ssub.s32 %s14, 2
      %s21 = sadd.s32 %s14, 1
      %s22 = ssub.s32 %s14, %s21
      %p23 = scmp.eq.s32.totalorder %s22, 0
      %s25 = sadd.s32 %s24, 1
      %s26 = scalar_select %p23, %s24, %s25
      %p29 = pneg %p23
      %p30 = scmp.eq.s32.totalorder %s14, 1
      %p31 = por %p29, %p30
      %p32 = scmp.ne.s32.totalorder %s24, %s27
      %p33 = scmp.eq.s32.totalorder %s14, 0
      %p34 = por %p32, %p33
      %p35 = scmp.ne.s32.totalorder %s24, %s27
      %p36 = scmp.eq.s32.totalorder %s19, 1
      %p37 = por %p35, %p36
      %p38 = scmp.ne.s32.totalorder %s27, %s28
      %p39 = scmp.eq.s32.totalorder %s19, 0
      %p40 = por %p38, %p39
      %p41 = scmp.ne.s32.totalorder %s27, %s28
      %p42 = scmp.eq.s32.totalorder %s20, 1
      %p43 = por %p41, %p42
      %p45 = scmp.ne.s32.totalorder %s28, %s44
      %p46 = scmp.eq.s32.totalorder %s20, 0
      %p47 = por %p45, %p46
      %s49 = sadd.s32 %s48, 1
      %p52 = scmp.eq.s32.totalorder %s14, 1
      %p53 = scmp.ne.s32.totalorder %s48, %s50
      %p54 = scmp.eq.s32.totalorder %s14, 0
      %p55 = por %p53, %p54
      %p56 = scmp.ne.s32.totalorder %s48, %s50
      %p57 = scmp.eq.s32.totalorder %s19, 1
      %p58 = por %p56, %p57
      %p59 = scmp.ne.s32.totalorder %s50, %s51
      %p60 = scmp.eq.s32.totalorder %s19, 0
      %p61 = por %p59, %p60
      %p62 = scmp.ne.s32.totalorder %s50, %s51
      %p63 = scmp.eq.s32.totalorder %s20, 1
      %p64 = por %p62, %p63
      %p66 = scmp.ne.s32.totalorder %s51, %s65
      %p67 = scmp.eq.s32.totalorder %s20, 0
      %p68 = por %p66, %p67
      %s70 = sadd.s32 %s69, 1
      %p73 = scmp.eq.s32.totalorder %s14, 1
      %p74 = scmp.ne.s32.totalorder %s69, %s71
      %p75 = scmp.eq.s32.totalorder %s14, 0
      %p76 = por %p74, %p75
      %p77 = scmp.ne.s32.totalorder %s69, %s71
      %p78 = scmp.eq.s32.totalorder %s19, 1
      %p79 = por %p77, %p78
      %p80 = scmp.ne.s32.totalorder %s71, %s72
      %p81 = scmp.eq.s32.totalorder %s19, 0
      %p82 = por %p80, %p81
      %p83 = scmp.ne.s32.totalorder %s71, %s72
      %p84 = scmp.eq.s32.totalorder %s20, 1
      %p85 = por %p83, %p84
      %p87 = scmp.ne.s32.totalorder %s72, %s86
      %p88 = scmp.eq.s32.totalorder %s20, 0
      %p89 = por %p87, %p88
      %s91 = sadd.s32 %s90, 1
      %p94 = scmp.eq.s32.totalorder %s14, 1
      %p95 = scmp.ne.s32.totalorder %s90, %s92
      %p96 = scmp.eq.s32.totalorder %s14, 0
      %p97 = por %p95, %p96
      %p98 = scmp.ne.s32.totalorder %s90, %s92
      %p99 = scmp.eq.s32.totalorder %s19, 1
      %p100 = por %p98, %p99
      %p101 = scmp.ne.s32.totalorder %s92, %s93
      %p102 = scmp.eq.s32.totalorder %s19, 0
      %p103 = por %p101, %p102
      %p104 = scmp.ne.s32.totalorder %s92, %s93
      %p105 = scmp.eq.s32.totalorder %s20, 1
      %p106 = por %p104, %p105
      %p108 = scmp.ne.s32.totalorder %s93, %s107
      %p109 = scmp.eq.s32.totalorder %s20, 0
      %p110 = por %p108, %p109
      %s112 = sadd.s32 %s111, 1
      %p115 = scmp.eq.s32.totalorder %s14, 1
      %p116 = scmp.ne.s32.totalorder %s111, %s113
      %p117 = scmp.eq.s32.totalorder %s14, 0
      %p118 = por %p116, %p117
      %p119 = scmp.ne.s32.totalorder %s111, %s113
      %p120 = scmp.eq.s32.totalorder %s19, 1
      %p121 = por %p119, %p120
      %p122 = scmp.ne.s32.totalorder %s113, %s114
      %p123 = scmp.eq.s32.totalorder %s19, 0
      %p124 = por %p122, %p123
      %p125 = scmp.ne.s32.totalorder %s113, %s114
      %p126 = scmp.eq.s32.totalorder %s20, 1
      %p127 = por %p125, %p126
      %p129 = scmp.ne.s32.totalorder %s114, %s128
      %p130 = scmp.eq.s32.totalorder %s20, 0
      %p131 = por %p129, %p130
      %s132 = ssub.s32 %s14, %s21
      %p133 = scmp.eq.s32.totalorder %s132, 0
      %s135 = sadd.s32 %s134, 1
      %s136 = scalar_select %p133, %s134, %s135
      %p139 = pneg %p133
      %p140 = scmp.eq.s32.totalorder %s14, 1
      %p141 = por %p139, %p140
      %p142 = scmp.ne.s32.totalorder %s134, %s137
      %p143 = scmp.eq.s32.totalorder %s14, 0
      %p144 = por %p142, %p143
      %p145 = scmp.ne.s32.totalorder %s134, %s137
      %p146 = scmp.eq.s32.totalorder %s19, 1
      %p147 = por %p145, %p146
      %p148 = scmp.ne.s32.totalorder %s137, %s138
      %p149 = scmp.eq.s32.totalorder %s19, 0
      %p150 = por %p148, %p149
      %p151 = scmp.ne.s32.totalorder %s137, %s138
      %p152 = scmp.eq.s32.totalorder %s20, 1
      %p153 = por %p151, %p152
      %p155 = scmp.ne.s32.totalorder %s138, %s154
      %p156 = scmp.eq.s32.totalorder %s20, 0
      %p157 = por %p155, %p156
      %p158 = scmp.le.s32.totalorder 1, %s14
      %p159 = scmp.lt.s32.totalorder %s14, 3
      %p160 = pnand %p158, %p159
      %p161 = pneg %p160
      // Predicated region
      $region9: #{tpu_custom_call.1} parent=5 // pred_check
        _
      $region10: #{tpu_custom_call.1} parent=5 // pred_check_branch
        %163 = sbr.rel (%p160) target = $region12
      $region11: #{tpu_custom_call.1} parent=5 // pred_region
        %s164 = ssub.s32 %s14, 1
        // Predicated region
        $region13: #{tpu_custom_call.1} parent=11 // pred_check
          %p165 = pneg %p61
        $region14: #{tpu_custom_call.1} parent=11 // pred_check_branch
          %167 = sbr.rel (%p165) target = $region16
        $region15: #{tpu_custom_call.1} parent=11 // pred_region
          _
        $region16: #{tpu_custom_call.1} parent=11 // pred_fallthru
          _
        // Predicated region
        $region17: #{tpu_custom_call.1} parent=11 // pred_check
          %p168 = pneg %p82
        $region18: #{tpu_custom_call.1} parent=11 // pred_check_branch
          %170 = sbr.rel (%p168) target = $region20
        $region19: #{tpu_custom_call.1} parent=11 // pred_region
          _
        $region20: #{tpu_custom_call.1} parent=11 // pred_fallthru
          _
        // Predicated region
        $region21: #{tpu_custom_call.1} parent=11 // pred_check
          %p171 = pneg %p103
        $region22: #{tpu_custom_call.1} parent=11 // pred_check_branch
          %173 = sbr.rel (%p171) target = $region24
        $region23: #{tpu_custom_call.1} parent=11 // pred_region
          _
        $region24: #{tpu_custom_call.1} parent=11 // pred_fallthru
          _
        // Predicated region
        $region25: #{tpu_custom_call.1} parent=11 // pred_check
          %p174 = pneg %p124
        $region26: #{tpu_custom_call.1} parent=11 // pred_check_branch
          %176 = sbr.rel (%p174) target = $region28
        $region27: #{tpu_custom_call.1} parent=11 // pred_region
          _
        $region28: #{tpu_custom_call.1} parent=11 // pred_fallthru
          _
      $region12: #{tpu_custom_call.1} parent=5 // pred_fallthru
        _
      %p177 = scmp.lt.s32.totalorder %s14, 2
      // Predicated region
      $region29: #{tpu_custom_call.1} parent=5 // pred_check
        %p178 = pneg %p177
      $region30: #{tpu_custom_call.1} parent=5 // pred_check_branch
        %180 = sbr.rel (%p178) target = $region32
      $region31: #{tpu_custom_call.1} parent=5 // pred_region
        // Predicated region
        $region33: #{tpu_custom_call.1} parent=31 // pred_check
          %p181 = pneg %p34
        $region34: #{tpu_custom_call.1} parent=31 // pred_check_branch
          %183 = sbr.rel (%p181) target = $region36
        $region35: #{tpu_custom_call.1} parent=31 // pred_region
          %s184 = smul.u32 16, %s14
          %p185 = scmp.lt.s32.totalorder %s184, 31
          %s186 = scalar_select %p185, %s184, 31
          %s187 = smul.addr %s186, 4
          %s188 = scalar_lea.vmem %s0, %s187
          %s189 = smul.u32 16, %s14
        $region36: #{tpu_custom_call.1} parent=31 // pred_fallthru
          _
      $region32: #{tpu_custom_call.1} parent=5 // pred_fallthru
        _
      %p190 = scmp.le.s32.totalorder 1, %s14
      %p191 = scmp.lt.s32.totalorder %s14, 3
      %p192 = pnand %p190, %p191
      %p193 = pneg %p192
      // Predicated region
      $region37: #{tpu_custom_call.1} parent=5 // pred_check
        _
      $region38: #{tpu_custom_call.1} parent=5 // pred_check_branch
        %195 = sbr.rel (%p192) target = $region40
      $region39: #{tpu_custom_call.1} parent=5 // pred_region
        %s196 = ssub.s32 %s14, 1
        %s197 = smul.u32 16, %s19
        %p198 = scmp.lt.s32.totalorder %s197, 31
        %s199 = scalar_select %p198, %s197, 31
        %s200 = smul.addr %s199, 4
        %s201 = scalar_lea.vmem %s0, %s200
        %p202 = pneg %p40
        %p203 = pneg %p37
        %p204 = pneg %p61
        %p205 = pneg %p58
        %p206 = pneg %p82
        %p207 = pneg %p79
        %p208 = pneg %p103
        %p209 = pneg %p100
        %p210 = pneg %p124
        %p211 = pneg %p121
        %p212 = pneg %p150
        %p213 = pneg %p147
        %s214 = sand.u32 %s137, 1
        %s215 = scalar_lea.sflag [#allocation3], %s214
        %s216 = sand.u32 %s137, 1
        %s217 = smul.addr %s216, 128
        %s218 = scalar_lea.vmem [#allocation2], %s217
        %s219 = smul.u32 16, %s19
        %p220 = scmp.lt.s32.totalorder %s219, 31
        %s221 = scalar_select %p220, %s219, 31
        %s222 = smul.addr %s221, 4
        %s223 = scalar_lea.vmem %s0, %s222
        %s224 = smul.u32 16, %s19
        %s225 = smul.u32 16, %s19
        %v227 = vld [vmem:[%s223] sm:$0xf]
        %v228 = vld [vmem:[%s223 + $0x4] sm:$0xf]
        %v229 = vld [vmem:[%s223 + $0x8] sm:$0xf]
        %v230 = vld [vmem:[%s223 + $0xc] sm:$0xf]
        %v231 = vld [vmem:[%s223 + $0x10] sm:$0xf]
        %v232 = vld [vmem:[%s223 + $0x14] sm:$0xf]
        %v233 = vld [vmem:[%s223 + $0x18] sm:$0xf]
        %v234 = vld [vmem:[%s223 + $0x1c] sm:$0xf]
        %v235 = vld [vmem:[%s223 + $0x20] sm:$0xf]
        %v236 = vld [vmem:[%s223 + $0x24] sm:$0xf]
        %v237 = vld [vmem:[%s223 + $0x28] sm:$0xf]
        %v238 = vld [vmem:[%s223 + $0x2c] sm:$0xf]
        %v239 = vld [vmem:[%s223 + $0x30] sm:$0xf]
        %v240 = vld [vmem:[%s223 + $0x34] sm:$0xf]
        %v241 = vld [vmem:[%s223 + $0x38] sm:$0xf]
        %v242 = vld [vmem:[%s223 + $0x3c] sm:$0xf]
        %v243 = vld [vmem:[%s1] sm:$0xf]
        %v244 = vld [vmem:[%s1 + $0x4] sm:$0xf]
        %v245 = vld [vmem:[%s1 + $0x8] sm:$0xf]
        %v246 = vld [vmem:[%s1 + $0xc] sm:$0xf]
        %v247 = vld [vmem:[%s1 + $0x10] sm:$0xf]
        %v248 = vld [vmem:[%s1 + $0x14] sm:$0xf]
        %v249 = vld [vmem:[%s1 + $0x18] sm:$0xf]
        %v250 = vld [vmem:[%s1 + $0x1c] sm:$0xf]
        %v251 = vld [vmem:[%s2] sm:$0x1]
        %v253 = vlaneseq
        %v254 = vshrl.u32 %v253, 7
        %v255 = vsub.s32 0, %v254
        %v256 = vrot.slane %v251, %v255
        %v274 = vunpack.c.l.b16 %v227
        %v275 = vunpack.c.l.b16 %v228
        %v276 = vunpack.c.l.b16 %v229
        %v277 = vunpack.c.l.b16 %v230
        %v278 = vunpack.c.l.b16 %v231
        %v279 = vunpack.c.l.b16 %v232
        %v280 = vunpack.c.l.b16 %v233
        %v281 = vunpack.c.l.b16 %v234
        %v282 = vunpack.c.l.b16 %v235
        %v283 = vunpack.c.l.b16 %v236
        %v284 = vunpack.c.l.b16 %v237
        %v285 = vunpack.c.l.b16 %v238
        %v286 = vunpack.c.l.b16 %v239
        %v287 = vunpack.c.l.b16 %v240
        %v288 = vunpack.c.l.b16 %v241
        %v289 = vunpack.c.l.b16 %v242
        %v290 = vpack.c.b16 %v275, %v274
        %v291 = vpack.c.b16 %v277, %v276
        %v292 = vpack.c.b16 %v279, %v278
        %v293 = vpack.c.b16 %v281, %v280
        %v294 = vpack.c.b16 %v283, %v282
        %v295 = vpack.c.b16 %v285, %v284
        %v296 = vpack.c.b16 %v287, %v286
        %v297 = vpack.c.b16 %v289, %v288
        %v306 = vunpack.c.l.b16 %v243
        %v307 = vunpack.c.l.b16 %v244
        %v308 = vunpack.c.l.b16 %v245
        %v309 = vunpack.c.l.b16 %v246
        %v310 = vunpack.c.l.b16 %v247
        %v311 = vunpack.c.l.b16 %v248
        %v312 = vunpack.c.l.b16 %v249
        %v313 = vunpack.c.l.b16 %v250
        %v314 = vpack.c.b16 %v307, %v306
        %v315 = vpack.c.b16 %v309, %v308
        %v316 = vpack.c.b16 %v311, %v310
        %v317 = vpack.c.b16 %v313, %v312
        %vm322 = vcmask 523264
        %v324 = vsel %vm322, %v290, 0
        %v327 = vsel %vm322, %v291, 0
        %v330 = vsel %vm322, %v292, 0
        %v333 = vsel %vm322, %v293, 0
        %v336 = vsel %vm322, %v294, 0
        %v339 = vsel %vm322, %v295, 0
        %v342 = vsel %vm322, %v296, 0
        %v345 = vsel %vm322, %v297, 0
        %347 = vmatprep.subr.bf16.mxu0 0
        %348 = vmatpush1.bf16.msra.mxu0 0
        %349 = vmatprep.subr.bf16.mxu0 0
        %350 = vmatpush1.bf16.msra.mxu0 0
        %351 = vmatprep.subr.bf16.mxu0 0
        %352 = vmatpush1.bf16.msra.mxu0 0
        %353 = vmatprep.subr.bf16.mxu0 0
        %354 = vmatpush1.bf16.msra.mxu0 0
        %355 = vmatprep.subr.bf16.mxu0 0
        %356 = vmatpush1.bf16.msra.mxu0 %v317
        %357 = vmatprep.subr.bf16.mxu0 0
        %358 = vmatpush1.bf16.msra.mxu0 %v316
        %359 = vmatprep.subr.bf16.mxu0 0
        %360 = vmatpush1.bf16.msra.mxu0 %v315
        %361 = vmatprep.subr.bf16.mxu0 0
        %362 = vmatpush1.bf16.msra.mxu0 %v314
        %363 = vmatprep.subr.bf16.mxu0 0
        %364 = vmatpush2.bf16.msra.mxu0 0
        %365 = vmatprep.subr.bf16.mxu0 0
        %366 = vmatpush2.bf16.msra.mxu0 0
        %367 = vmatprep.subr.bf16.mxu0 0
        %368 = vmatpush2.bf16.msra.mxu0 0
        %369 = vmatprep.subr.bf16.mxu0 0
        %370 = vmatpush2.bf16.msra.mxu0 0
        %371 = vmatprep.subr.bf16.mxu0 0
        %372 = vmatpush2.bf16.msra.mxu0 0
        %373 = vmatprep.subr.bf16.mxu0 0
        %374 = vmatpush2.bf16.msra.mxu0 0
        %375 = vmatprep.subr.bf16.mxu0 0
        %376 = vmatpush2.bf16.msra.mxu0 0
        %377 = vmatprep.subr.bf16.mxu0 0
        %378 = vmatpush2.bf16.msra.mxu0 0
        %379 = vmatprep.mubr.bf16.mxu0 0
        %380 = vmatmul.mubr.bf16.gmra.mxu0 %v324
        %v381 = vpop.f32.mrf.mxu0
        %v382 = vadd.f32 %v256, %v381
        %v383 = vpop.f32.mrf.mxu0
        %v384 = vpop.f32.mrf.mxu0
        %v385 = vadd.f32 %v256, %v384
        %v386 = vpop.f32.mrf.mxu0
        %387 = vmatprep.mubr.bf16.mxu0 0
        %388 = vmatmul.mubr.bf16.gmra.mxu0 %v327
        %v389 = vpop.f32.mrf.mxu0
        %v390 = vadd.f32 %v256, %v389
        %v391 = vpop.f32.mrf.mxu0
        %v392 = vpop.f32.mrf.mxu0
        %v393 = vadd.f32 %v256, %v392
        %v394 = vpop.f32.mrf.mxu0
        %395 = vmatprep.mubr.bf16.mxu0 0
        %396 = vmatmul.mubr.bf16.gmra.mxu0 %v330
        %v397 = vpop.f32.mrf.mxu0
        %v398 = vadd.f32 %v256, %v397
        %v399 = vpop.f32.mrf.mxu0
        %v400 = vpop.f32.mrf.mxu0
        %v401 = vadd.f32 %v256, %v400
        %v402 = vpop.f32.mrf.mxu0
        %403 = vmatprep.mubr.bf16.mxu0 0
        %404 = vmatmul.mubr.bf16.gmra.mxu0 %v333
        %v405 = vpop.f32.mrf.mxu0
        %v406 = vadd.f32 %v256, %v405
        %v407 = vpop.f32.mrf.mxu0
        %v408 = vpop.f32.mrf.mxu0
        %v409 = vadd.f32 %v256, %v408
        %v410 = vpop.f32.mrf.mxu0
        %411 = vmatprep.mubr.bf16.mxu0 0
        %412 = vmatmul.mubr.bf16.gmra.mxu0 %v336
        %v413 = vpop.f32.mrf.mxu0
        %v414 = vadd.f32 %v256, %v413
        %v415 = vpop.f32.mrf.mxu0
        %v416 = vpop.f32.mrf.mxu0
        %v417 = vadd.f32 %v256, %v416
        %v418 = vpop.f32.mrf.mxu0
        %419 = vmatprep.mubr.bf16.mxu0 0
        %420 = vmatmul.mubr.bf16.gmra.mxu0 %v339
        %v421 = vpop.f32.mrf.mxu0
        %v422 = vadd.f32 %v256, %v421
        %v423 = vpop.f32.mrf.mxu0
        %v424 = vpop.f32.mrf.mxu0
        %v425 = vadd.f32 %v256, %v424
        %v426 = vpop.f32.mrf.mxu0
        %427 = vmatprep.mubr.bf16.mxu0 0
        %428 = vmatmul.mubr.bf16.gmra.mxu0 %v342
        %v429 = vpop.f32.mrf.mxu0
        %v430 = vadd.f32 %v256, %v429
        %v431 = vpop.f32.mrf.mxu0
        %v432 = vpop.f32.mrf.mxu0
        %v433 = vadd.f32 %v256, %v432
        %v434 = vpop.f32.mrf.mxu0
        %435 = vmatprep.mubr.bf16.mxu0 0
        %436 = vmatmul.mubr.bf16.gmra.mxu0 %v345
        %v437 = vpop.f32.mrf.mxu0
        %v438 = vadd.f32 %v256, %v437
        %v439 = vpop.f32.mrf.mxu0
        %v440 = vpop.f32.mrf.mxu0
        %v441 = vadd.f32 %v256, %v440
        %v442 = vpop.f32.mrf.mxu0
        %443 = vdwg.mxu0
        %v444 = vmax.f32 %v382, 0.0
        %v445 = vmax.f32 %v385, 0.0
        %v446 = vmax.f32 %v390, 0.0
        %v447 = vmax.f32 %v393, 0.0
        %v448 = vmax.f32 %v398, 0.0
        %v449 = vmax.f32 %v401, 0.0
        %v450 = vmax.f32 %v406, 0.0
        %v451 = vmax.f32 %v409, 0.0
        %v452 = vmax.f32 %v414, 0.0
        %v453 = vmax.f32 %v417, 0.0
        %v454 = vmax.f32 %v422, 0.0
        %v455 = vmax.f32 %v425, 0.0
        %v456 = vmax.f32 %v430, 0.0
        %v457 = vmax.f32 %v433, 0.0
        %v458 = vmax.f32 %v438, 0.0
        %v459 = vmax.f32 %v441, 0.0
        %v460 = vld [vmem:[%s3] sm:$0xf]
        %v461 = vld [vmem:[%s3 + $0x4] sm:$0xf]
        %v462 = vld [vmem:[%s3 + $0x8] sm:$0xf]
        %v463 = vld [vmem:[%s3 + $0xc] sm:$0xf]
        %v464 = vld [vmem:[%s3 + $0x10] sm:$0xf]
        %v465 = vld [vmem:[%s3 + $0x14] sm:$0xf]
        %v466 = vld [vmem:[%s3 + $0x18] sm:$0xf]
        %v467 = vld [vmem:[%s3 + $0x1c] sm:$0xf]
        %v468 = vld [vmem:[%s3 + $0x20] sm:$0xf]
        %v469 = vld [vmem:[%s3 + $0x24] sm:$0xf]
        %v470 = vld [vmem:[%s3 + $0x28] sm:$0xf]
        %v471 = vld [vmem:[%s3 + $0x2c] sm:$0xf]
        %v472 = vld [vmem:[%s3 + $0x30] sm:$0xf]
        %v473 = vld [vmem:[%s3 + $0x34] sm:$0xf]
        %v474 = vld [vmem:[%s3 + $0x38] sm:$0xf]
        %v475 = vld [vmem:[%s3 + $0x3c] sm:$0xf]
        %v476 = vpack.c.bf16 %v445, %v444
        %v477 = vpack.c.bf16 %v447, %v446
        %v478 = vpack.c.bf16 %v449, %v448
        %v479 = vpack.c.bf16 %v451, %v450
        %v480 = vpack.c.bf16 %v453, %v452
        %v481 = vpack.c.bf16 %v455, %v454
        %v482 = vpack.c.bf16 %v457, %v456
        %v483 = vpack.c.bf16 %v459, %v458
        %v484 = vld [vmem:[%s4] sm:$0x1]
        %v486 = vlaneseq
        %v487 = vshrl.u32 %v486, 7
        %v488 = vsub.s32 0, %v487
        %v489 = vrot.slane %v484, %v488
        %v507 = vunpack.c.l.b16 %v460
        %v508 = vunpack.c.l.b16 %v461
        %v509 = vunpack.c.l.b16 %v462
        %v510 = vunpack.c.l.b16 %v463
        %v511 = vunpack.c.l.b16 %v464
        %v512 = vunpack.c.l.b16 %v465
        %v513 = vunpack.c.l.b16 %v466
        %v514 = vunpack.c.l.b16 %v467
        %v515 = vunpack.c.l.b16 %v468
        %v516 = vunpack.c.l.b16 %v469
        %v517 = vunpack.c.l.b16 %v470
        %v518 = vunpack.c.l.b16 %v471
        %v519 = vunpack.c.l.b16 %v472
        %v520 = vunpack.c.l.b16 %v473
        %v521 = vunpack.c.l.b16 %v474
        %v522 = vunpack.c.l.b16 %v475
        %v523 = vpack.c.b16 %v508, %v507
        %v524 = vpack.c.b16 %v510, %v509
        %v525 = vpack.c.b16 %v512, %v511
        %v526 = vpack.c.b16 %v514, %v513
        %v527 = vpack.c.b16 %v516, %v515
        %v528 = vpack.c.b16 %v518, %v517
        %v529 = vpack.c.b16 %v520, %v519
        %v530 = vpack.c.b16 %v522, %v521
        %539 = vmatprep.subr.bf16.mxu0 0
        %540 = vmatpush1.bf16.msra.mxu0 %v530
        %541 = vmatprep.subr.bf16.mxu0 0
        %542 = vmatpush1.bf16.msra.mxu0 %v529
        %543 = vmatprep.subr.bf16.mxu0 0
        %544 = vmatpush1.bf16.msra.mxu0 %v528
        %545 = vmatprep.subr.bf16.mxu0 0
        %546 = vmatpush1.bf16.msra.mxu0 %v527
        %547 = vmatprep.subr.bf16.mxu0 0
        %548 = vmatpush1.bf16.msra.mxu0 %v526
        %549 = vmatprep.subr.bf16.mxu0 0
        %550 = vmatpush1.bf16.msra.mxu0 %v525
        %551 = vmatprep.subr.bf16.mxu0 0
        %552 = vmatpush1.bf16.msra.mxu0 %v524
        %553 = vmatprep.subr.bf16.mxu0 0
        %554 = vmatpush1.bf16.msra.mxu0 %v523
        %555 = vmatprep.subr.bf16.mxu0 0
        %556 = vmatpush2.bf16.msra.mxu0 0
        %557 = vmatprep.subr.bf16.mxu0 0
        %558 = vmatpush2.bf16.msra.mxu0 0
        %559 = vmatprep.subr.bf16.mxu0 0
        %560 = vmatpush2.bf16.msra.mxu0 0
        %561 = vmatprep.subr.bf16.mxu0 0
        %562 = vmatpush2.bf16.msra.mxu0 0
        %563 = vmatprep.subr.bf16.mxu0 0
        %564 = vmatpush2.bf16.msra.mxu0 0
        %565 = vmatprep.subr.bf16.mxu0 0
        %566 = vmatpush2.bf16.msra.mxu0 0
        %567 = vmatprep.subr.bf16.mxu0 0
        %568 = vmatpush2.bf16.msra.mxu0 0
        %569 = vmatprep.subr.bf16.mxu0 0
        %570 = vmatpush2.bf16.msra.mxu0 0
        %571 = vmatprep.mubr.bf16.mxu0 0
        %572 = vmatmul.mubr.bf16.gmra.mxu0 %v476
        %v573 = vpop.f32.mrf.mxu0
        %v574 = vadd.f32 %v489, %v573
        %v575 = vpop.f32.mrf.mxu0
        %v576 = vpop.f32.mrf.mxu0
        %v577 = vadd.f32 %v489, %v576
        %v578 = vpop.f32.mrf.mxu0
        %579 = vmatprep.mubr.bf16.mxu0 0
        %580 = vmatmul.mubr.bf16.gmra.mxu0 %v477
        %v581 = vpop.f32.mrf.mxu0
        %v582 = vadd.f32 %v489, %v581
        %v583 = vpop.f32.mrf.mxu0
        %v584 = vpop.f32.mrf.mxu0
        %v585 = vadd.f32 %v489, %v584
        %v586 = vpop.f32.mrf.mxu0
        %587 = vmatprep.mubr.bf16.mxu0 0
        %588 = vmatmul.mubr.bf16.gmra.mxu0 %v478
        %v589 = vpop.f32.mrf.mxu0
        %v590 = vadd.f32 %v489, %v589
        %v591 = vpop.f32.mrf.mxu0
        %v592 = vpop.f32.mrf.mxu0
        %v593 = vadd.f32 %v489, %v592
        %v594 = vpop.f32.mrf.mxu0
        %595 = vmatprep.mubr.bf16.mxu0 0
        %596 = vmatmul.mubr.bf16.gmra.mxu0 %v479
        %v597 = vpop.f32.mrf.mxu0
        %v598 = vadd.f32 %v489, %v597
        %v599 = vpop.f32.mrf.mxu0
        %v600 = vpop.f32.mrf.mxu0
        %v601 = vadd.f32 %v489, %v600
        %v602 = vpop.f32.mrf.mxu0
        %603 = vmatprep.mubr.bf16.mxu0 0
        %604 = vmatmul.mubr.bf16.gmra.mxu0 %v480
        %v605 = vpop.f32.mrf.mxu0
        %v606 = vadd.f32 %v489, %v605
        %v607 = vpop.f32.mrf.mxu0
        %v608 = vpop.f32.mrf.mxu0
        %v609 = vadd.f32 %v489, %v608
        %v610 = vpop.f32.mrf.mxu0
        %611 = vmatprep.mubr.bf16.mxu0 0
        %612 = vmatmul.mubr.bf16.gmra.mxu0 %v481
        %v613 = vpop.f32.mrf.mxu0
        %v614 = vadd.f32 %v489, %v613
        %v615 = vpop.f32.mrf.mxu0
        %v616 = vpop.f32.mrf.mxu0
        %v617 = vadd.f32 %v489, %v616
        %v618 = vpop.f32.mrf.mxu0
        %619 = vmatprep.mubr.bf16.mxu0 0
        %620 = vmatmul.mubr.bf16.gmra.mxu0 %v482
        %v621 = vpop.f32.mrf.mxu0
        %v622 = vadd.f32 %v489, %v621
        %v623 = vpop.f32.mrf.mxu0
        %v624 = vpop.f32.mrf.mxu0
        %v625 = vadd.f32 %v489, %v624
        %v626 = vpop.f32.mrf.mxu0
        %627 = vmatprep.mubr.bf16.mxu0 0
        %628 = vmatmul.mubr.bf16.gmra.mxu0 %v483
        %v629 = vpop.f32.mrf.mxu0
        %v630 = vadd.f32 %v489, %v629
        %v631 = vpop.f32.mrf.mxu0
        %v632 = vpop.f32.mrf.mxu0
        %v633 = vadd.f32 %v489, %v632
        %v634 = vpop.f32.mrf.mxu0
        %635 = vdwg.mxu0
        %636 = vst [vmem:[%s218] sm:$0xff] %v574
        %637 = vst [vmem:[%s218 + $0x8] sm:$0xff] %v577
        %638 = vst [vmem:[%s218 + $0x10] sm:$0xff] %v582
        %639 = vst [vmem:[%s218 + $0x18] sm:$0xff] %v585
        %640 = vst [vmem:[%s218 + $0x20] sm:$0xff] %v590
        %641 = vst [vmem:[%s218 + $0x28] sm:$0xff] %v593
        %642 = vst [vmem:[%s218 + $0x30] sm:$0xff] %v598
        %643 = vst [vmem:[%s218 + $0x38] sm:$0xff] %v601
        %644 = vst [vmem:[%s218 + $0x40] sm:$0xff] %v606
        %645 = vst [vmem:[%s218 + $0x48] sm:$0xff] %v609
        %646 = vst [vmem:[%s218 + $0x50] sm:$0xff] %v614
        %647 = vst [vmem:[%s218 + $0x58] sm:$0xff] %v617
        %648 = vst [vmem:[%s218 + $0x60] sm:$0xff] %v622
        %649 = vst [vmem:[%s218 + $0x68] sm:$0xff] %v625
        %650 = vst [vmem:[%s218 + $0x70] sm:$0xff] %v630
        %651 = vst [vmem:[%s218 + $0x78] sm:$0xff] %v633
        %s652 = sand.u32 %s137, 1
        %s653 = scalar_lea.sflag [#allocation3], %s652
        %s654 = sand.u32 %s137, 1
        %s655 = smul.addr %s654, 128
        %s656 = scalar_lea.vmem [#allocation2], %s655
        // Predicated region
        $region41: #{tpu_custom_call.1} parent=39 // pred_check
          %p657 = pneg %p147
        $region42: #{tpu_custom_call.1} parent=39 // pred_check_branch
          %659 = sbr.rel (%p657) target = $region44
        $region43: #{tpu_custom_call.1} parent=39 // pred_region
          %s660 = smul.u32 16, %s19
          %s662 = ssub.s32 2048, 2048
          %663 = vsyncadd %s653, %s662
          %s664 = smul.addr %s660, 128
          %s665 = scalar_lea.hbm %s5, %s664
          %s666 = sshll.u32 %s656, 4
          %s667 = int_to_ptr.vmem [resolvable:$true] %s666
          %672 = dma.vmem_to_hbm [thread:$0]  %s667, 2048, %s665, %s653, 128, 128, 8
        $region44: #{tpu_custom_call.1} parent=39 // pred_fallthru
          _
      $region40: #{tpu_custom_call.1} parent=5 // pred_fallthru
        _
      %p673 = scmp.le.s32.totalorder 2, %s14
      // Predicated region
      $region45: #{tpu_custom_call.1} parent=5 // pred_check
        %p674 = pneg %p673
      $region46: #{tpu_custom_call.1} parent=5 // pred_check_branch
        %676 = sbr.rel (%p674) target = $region48
      $region47: #{tpu_custom_call.1} parent=5 // pred_region
        %s677 = ssub.s32 %s14, 2
        // Predicated region
        $region49: #{tpu_custom_call.1} parent=47 // pred_check
          %p678 = pneg %p153
        $region50: #{tpu_custom_call.1} parent=47 // pred_check_branch
          %680 = sbr.rel (%p678) target = $region52
        $region51: #{tpu_custom_call.1} parent=47 // pred_region
          %s681 = sand.u32 %s138, 1
          %s682 = scalar_lea.sflag [#allocation3], %s681
          %s683 = sand.u32 %s138, 1
          %s684 = smul.addr %s683, 128
          %s685 = scalar_lea.vmem [#allocation2], %s684
          %686 = dma.done %s682, 2048
        $region52: #{tpu_custom_call.1} parent=47 // pred_fallthru
          _
      $region48: #{tpu_custom_call.1} parent=5 // pred_fallthru
        _
    $region6: #{tpu_custom_call.1} parent=1 // loop_footer
      %s18 = sadd.s32 1, %s14
    $region7: #{tpu_custom_call.1} parent=1 // loop_footer_branch
      %13 = sbr.rel target = $region3
    $region8: #{tpu_custom_call.1} parent=1 // loop_exit
      _
    %687 = vsyncpa [#allocation3], 1
    %s688 = scalar_lea.sflag [#allocation3], 1
    %689 = vsyncpa %s688, 1

</llo_original>
